<compile_context>
chip_gen: v7x
topology: tpu7x:2x2x1
jax: 0.10.0
libtpu: 0.0.40
codegen_flags: <defaults>
</compile_context>

<pallas_src>
import functools
import math

import jax
import jax.numpy as jnp
from jax.experimental import pallas as pl
from jax.experimental.pallas import tpu as pltpu


def rgcn_kernel(f_out, a_ref, x_ref, w_ref, wself_ref, gamma_ref, betab_ref,
                out_ref, y_ref):
    """Single-invocation fused RGCN forward.

    a_ref     : (N, T*N)        bf16   A_flat[i, t*N + j] = adj[t, i, j]
    x_ref     : (N, F_in)       bf16
    w_ref     : (T, F_in, F_pad) bf16  per-type weights, zero-padded lanes
    wself_ref : (F_in, F_pad)   bf16   zero-padded lanes
    gamma_ref : (1, F_pad)      f32    LN gamma, zero in pad lanes
    betab_ref : (1, F_pad)      f32    LN beta + bias, zero in pad lanes
    out_ref   : (N, F_pad)      f32
    y_ref     : (T*N, F_pad)    f32    VMEM scratch for stacked x @ W_t
    """
    n_types = w_ref.shape[0]
    n = x_ref.shape[0]
    x = x_ref[...]

    # Self-loop projection (independent of message passing; scheduler overlaps it).
    h_self = jnp.dot(x, wself_ref[...], preferred_element_type=jnp.float32)

    # Per-edge-type projection: Y[t*N + j, o] = (x @ W_t)[j, o].
    # Static slice offsets (multiples of N, N % 8 == 0) -> aligned sublane stores.
    for t in range(n_types):
        y_ref[t * n:(t + 1) * n, :] = jnp.dot(
            x, w_ref[t], preferred_element_type=jnp.float32)

    # Aggregation over neighbours AND edge types in one lane-dense MXU call
    # with a 256-deep contraction:
    #   h[i, o] = sum_{t, j} adj[t, i, j] * Y[t*N + j, o]
    # Kept in f32 so only leaf operands carry bf16 rounding.
    h = jnp.dot(a_ref[...].astype(jnp.float32), y_ref[...],
                preferred_element_type=jnp.float32)

    # LayerNorm over the true f_out features. Pad lanes of h are exactly zero
    # (weights were zero-padded), so lane sums equal sums over real features.
    inv_f = 1.0 / f_out
    mean = jnp.sum(h, axis=-1, keepdims=True) * inv_f
    lane = jax.lax.broadcasted_iota(jnp.int32, h.shape, 1)
    hc = jnp.where(lane < f_out, h - mean, 0.0)
    var = jnp.sum(hc * hc, axis=-1, keepdims=True) * inv_f
    hn = hc * jax.lax.rsqrt(var + 1e-5)

    # affine + (bias folded into beta) + self loop; pad lanes stay zero.
    out_ref[...] = (hn * gamma_ref[...] + betab_ref[...] + h_self).astype(out_ref.dtype)


def rgcn_layer(x, weight, adj, w_self, bias, gamma, beta):
    N, F_in = x.shape
    T, _, F_out = weight.shape
    F_pad = ((F_out + 127) // 128) * 128  # lane-dense output width

    # bf16 leaves for the MXU / halved DMA bytes; f32 accumulation in-kernel.
    xb = x.astype(jnp.bfloat16)
    # A_flat[i, t*N + j] = adj[t, i, j]
    a_flat = jnp.transpose(adj, (1, 0, 2)).reshape(N, T * N).astype(jnp.bfloat16)
    # Per-type weights, lanes zero-padded to F_pad.
    w_pad = jnp.pad(weight, ((0, 0), (0, 0), (0, F_pad - F_out))).astype(jnp.bfloat16)
    w_self_p = jnp.pad(w_self, ((0, 0), (0, F_pad - F_out))).astype(jnp.bfloat16)
    gamma_p = jnp.pad(gamma, (0, F_pad - F_out)).reshape(1, F_pad).astype(jnp.float32)
    betab_p = jnp.pad(beta + bias, (0, F_pad - F_out)).reshape(1, F_pad).astype(jnp.float32)

    out_p = pl.pallas_call(
        functools.partial(rgcn_kernel, F_out),
        out_shape=jax.ShapeDtypeStruct((N, F_pad), jnp.float32),
        grid_spec=pltpu.PrefetchScalarGridSpec(
            num_scalar_prefetch=0,
            grid=(1,),
            in_specs=[
                pl.BlockSpec((N, T * N), lambda i: (0, 0)),         # A_flat
                pl.BlockSpec((N, F_in), lambda i: (0, 0)),          # x
                pl.BlockSpec((T, F_in, F_pad), lambda i: (0, 0, 0)),  # W (per type)
                pl.BlockSpec((F_in, F_pad), lambda i: (0, 0)),      # W_self
                pl.BlockSpec((1, F_pad), lambda i: (0, 0)),         # gamma
                pl.BlockSpec((1, F_pad), lambda i: (0, 0)),         # beta + bias
            ],
            out_specs=pl.BlockSpec((N, F_pad), lambda i: (0, 0)),
            scratch_shapes=[pltpu.VMEM((T * N, F_pad), jnp.float32)],
        ),
        compiler_params=pltpu.CompilerParams(
            dimension_semantics=("arbitrary",)),
    )(a_flat, xb, w_pad, w_self_p, gamma_p, betab_p)

    return out_p[:, :F_out]


def xavier_uniform(key, shape, gain):
    # fan_in / fan_out following torch convention for 2D / 3D tensors
    if len(shape) == 2:
        fan_in, fan_out = shape[0], shape[1]
    else:  # (T, F_in, F_out)
        receptive = shape[2]
        fan_in = shape[1] * receptive
        fan_out = shape[0] * receptive
    bound = gain * math.sqrt(6.0 / (fan_in + fan_out))
    return jax.random.uniform(key, shape, jnp.float32, -bound, bound)


def reference(x, weight, adj, w_self, bias, gamma, beta):
    h = jnp.einsum('nf,tfo->tno', x, weight)          # x @ W_t
    h_sum = jnp.einsum('tij,tjo->io', adj, h)         # sum_t A_t @ h_t
    mean = jnp.mean(h_sum, axis=-1, keepdims=True)
    var = jnp.mean((h_sum - mean) ** 2, axis=-1, keepdims=True)
    out = (h_sum - mean) / jnp.sqrt(var + 1e-5) * gamma + beta
    out = out + bias
    out = out + x @ w_self
    return out


if __name__ == "__main__":
    N, F_in, F_out, T, E = 64, 32, 32, 4, 256
    key = jax.random.PRNGKey(0)
    k_x, k_src, k_dst, k_et, k_w, k_ws = jax.random.split(key, 6)

    x = jax.random.normal(k_x, (N, F_in), jnp.float32)

    # synthetic knowledge-graph edges
    src = jax.random.randint(k_src, (E,), 0, N)
    dst = jax.random.randint(k_dst, (E,), 0, N)
    etype = jax.random.randint(k_et, (E,), 0, T)
    edge_weight = jnp.ones((E,), jnp.float32)

    # graph.row_norm(): normalize by destination-row degree over the FULL graph
    deg = jnp.zeros((N,), jnp.float32).at[dst].add(edge_weight)
    deg = jnp.where(deg == 0.0, 1.0, deg)
    w_norm = edge_weight / deg[dst]

    # dense per-edge-type adjacency (glue; spmm equivalent)
    adj = jnp.zeros((T, N, N), jnp.float32).at[etype, dst, src].add(w_norm)

    # deterministic parameter init (xavier_uniform, relu gain; zero bias;
    # LayerNorm gamma=1, beta=0)
    gain = math.sqrt(2.0)
    weight = xavier_uniform(k_w, (T, F_in, F_out), gain)
    w_self = xavier_uniform(k_ws, (F_in, F_out), gain)
    bias = jnp.zeros((F_out,), jnp.float32)
    gamma = jnp.ones((F_out,), jnp.float32)
    beta = jnp.zeros((F_out,), jnp.float32)

    out = rgcn_layer(x, weight, adj, w_self, bias, gamma, beta)
    out = jax.block_until_ready(out)

    # Reference uses the same bf16-rounded leaf operands the kernel consumes
    # (all accumulation in both paths is f32).
    xq = x.astype(jnp.bfloat16).astype(jnp.float32)
    adjq = adj.astype(jnp.bfloat16).astype(jnp.float32)
    wq = weight.astype(jnp.bfloat16).astype(jnp.float32)
    wsq = w_self.astype(jnp.bfloat16).astype(jnp.float32)
    ref = reference(xq, wq, adjq, wsq, bias, gamma, beta)

    assert out.shape == (N, F_out)
    assert jnp.allclose(out, ref, atol=1e-3, rtol=1e-3), "mismatch vs reference"

    # TODO(synk): num_bases < num_edge_types (alpha basis mixing) and the 'bdd'
    # regularizer path are not exercised here (default basis path w/ full bases).
    print("KERNEL_OK")
</pallas_src>

<mosaic_0001>
module attributes {stable_mosaic.version = 11 : i64} {
  func.func @rgcn_kernel(%arg0: i32, %arg1: memref<64x256xbf16, #tpu.memory_space<vmem>>, %arg2: memref<64x32xbf16, #tpu.memory_space<vmem>>, %arg3: memref<4x32x128xbf16, #tpu.memory_space<vmem>>, %arg4: memref<32x128xbf16, #tpu.memory_space<vmem>>, %arg5: memref<1x128xf32, #tpu.memory_space<vmem>>, %arg6: memref<1x128xf32, #tpu.memory_space<vmem>>, %arg7: memref<64x128xf32, #tpu.memory_space<vmem>>, %arg8: memref<256x128xf32, #tpu.memory_space<vmem>>) attributes {dimension_semantics = [#tpu.dimension_semantics<arbitrary>], iteration_bounds = array<i64: 1>, scalar_prefetch = 0 : i64, scratch_operands = 1 : i64, tpu.core_type = #tpu.core_type<tc>, window_params = [{pipeline_mode = #tpu.pipeline_mode<synchronous>, transform_indices = @transform_0, window_bounds = array<i64: 64, 256>}, {pipeline_mode = #tpu.pipeline_mode<synchronous>, transform_indices = @transform_1, window_bounds = array<i64: 64, 32>}, {pipeline_mode = #tpu.pipeline_mode<synchronous>, transform_indices = @transform_2, window_bounds = array<i64: 4, 32, 128>}, {pipeline_mode = #tpu.pipeline_mode<synchronous>, transform_indices = @transform_3, window_bounds = array<i64: 32, 128>}, {pipeline_mode = #tpu.pipeline_mode<synchronous>, transform_indices = @transform_4, window_bounds = array<i64: 1, 128>}, {pipeline_mode = #tpu.pipeline_mode<synchronous>, transform_indices = @transform_5, window_bounds = array<i64: 1, 128>}, {pipeline_mode = #tpu.pipeline_mode<synchronous>, transform_indices = @transform_6, window_bounds = array<i64: 64, 128>}]} {
    %c0 = arith.constant 0 : index
    %c0_0 = arith.constant 0 : index
    %0 = vector.load %arg2[%c0, %c0_0] : memref<64x32xbf16, #tpu.memory_space<vmem>>, vector<64x32xbf16>
    %c0_1 = arith.constant 0 : index
    %c0_2 = arith.constant 0 : index
    %1 = vector.load %arg4[%c0_1, %c0_2] : memref<32x128xbf16, #tpu.memory_space<vmem>>, vector<32x128xbf16>
    %cst = arith.constant dense<0.000000e+00> : vector<64x128xf32>
    %2 = tpu.matmul %0, %1, %cst {dimension_numbers = #tpu.dot_dimension_numbers<[1], [0], [0], [1], [0, 0, 1, 1], [], []>} : vector<64x32xbf16>, vector<32x128xbf16>, vector<64x128xf32> -> vector<64x128xf32>
    %c0_3 = arith.constant 0 : index
    %c0_4 = arith.constant 0 : index
    %c0_5 = arith.constant 0 : index
    %3 = vector.load %arg3[%c0_3, %c0_4, %c0_5] : memref<4x32x128xbf16, #tpu.memory_space<vmem>>, vector<1x32x128xbf16>
    %4 = vector.shape_cast %3 : vector<1x32x128xbf16> to vector<32x128xbf16>
    %cst_6 = arith.constant dense<0.000000e+00> : vector<64x128xf32>
    %5 = tpu.matmul %0, %4, %cst_6 {dimension_numbers = #tpu.dot_dimension_numbers<[1], [0], [0], [1], [0, 0, 1, 1], [], []>} : vector<64x32xbf16>, vector<32x128xbf16>, vector<64x128xf32> -> vector<64x128xf32>
    %c0_7 = arith.constant 0 : index
    %c0_8 = arith.constant 0 : index
    %6 = vector.load %arg8[%c0_7, %c0_8] : memref<256x128xf32, #tpu.memory_space<vmem>>, vector<64x128xf32>
    tpu.vector_store %arg8[%c0_7, %c0_8], %5 {strides = array<i32>} : memref<256x128xf32, #tpu.memory_space<vmem>>, vector<64x128xf32>,
    %c1 = arith.constant 1 : index
    %c0_9 = arith.constant 0 : index
    %c0_10 = arith.constant 0 : index
    %7 = vector.load %arg3[%c1, %c0_9, %c0_10] : memref<4x32x128xbf16, #tpu.memory_space<vmem>>, vector<1x32x128xbf16>
    %8 = vector.shape_cast %7 : vector<1x32x128xbf16> to vector<32x128xbf16>
    %cst_11 = arith.constant dense<0.000000e+00> : vector<64x128xf32>
    %9 = tpu.matmul %0, %8, %cst_11 {dimension_numbers = #tpu.dot_dimension_numbers<[1], [0], [0], [1], [0, 0, 1, 1], [], []>} : vector<64x32xbf16>, vector<32x128xbf16>, vector<64x128xf32> -> vector<64x128xf32>
    %c64 = arith.constant 64 : index
    %c0_12 = arith.constant 0 : index
    %10 = vector.load %arg8[%c64, %c0_12] : memref<256x128xf32, #tpu.memory_space<vmem>>, vector<64x128xf32>
    tpu.vector_store %arg8[%c64, %c0_12], %9 {strides = array<i32>} : memref<256x128xf32, #tpu.memory_space<vmem>>, vector<64x128xf32>,
    %c2 = arith.constant 2 : index
    %c0_13 = arith.constant 0 : index
    %c0_14 = arith.constant 0 : index
    %11 = vector.load %arg3[%c2, %c0_13, %c0_14] : memref<4x32x128xbf16, #tpu.memory_space<vmem>>, vector<1x32x128xbf16>
    %12 = vector.shape_cast %11 : vector<1x32x128xbf16> to vector<32x128xbf16>
    %cst_15 = arith.constant dense<0.000000e+00> : vector<64x128xf32>
    %13 = tpu.matmul %0, %12, %cst_15 {dimension_numbers = #tpu.dot_dimension_numbers<[1], [0], [0], [1], [0, 0, 1, 1], [], []>} : vector<64x32xbf16>, vector<32x128xbf16>, vector<64x128xf32> -> vector<64x128xf32>
    %c128 = arith.constant 128 : index
    %c0_16 = arith.constant 0 : index
    %14 = vector.load %arg8[%c128, %c0_16] : memref<256x128xf32, #tpu.memory_space<vmem>>, vector<64x128xf32>
    tpu.vector_store %arg8[%c128, %c0_16], %13 {strides = array<i32>} : memref<256x128xf32, #tpu.memory_space<vmem>>, vector<64x128xf32>,
    %c3 = arith.constant 3 : index
    %c0_17 = arith.constant 0 : index
    %c0_18 = arith.constant 0 : index
    %15 = vector.load %arg3[%c3, %c0_17, %c0_18] : memref<4x32x128xbf16, #tpu.memory_space<vmem>>, vector<1x32x128xbf16>
    %16 = vector.shape_cast %15 : vector<1x32x128xbf16> to vector<32x128xbf16>
    %cst_19 = arith.constant dense<0.000000e+00> : vector<64x128xf32>
    %17 = tpu.matmul %0, %16, %cst_19 {dimension_numbers = #tpu.dot_dimension_numbers<[1], [0], [0], [1], [0, 0, 1, 1], [], []>} : vector<64x32xbf16>, vector<32x128xbf16>, vector<64x128xf32> -> vector<64x128xf32>
    %c192 = arith.constant 192 : index
    %c0_20 = arith.constant 0 : index
    %18 = vector.load %arg8[%c192, %c0_20] : memref<256x128xf32, #tpu.memory_space<vmem>>, vector<64x128xf32>
    tpu.vector_store %arg8[%c192, %c0_20], %17 {strides = array<i32>} : memref<256x128xf32, #tpu.memory_space<vmem>>, vector<64x128xf32>,
    %c0_21 = arith.constant 0 : index
    %c0_22 = arith.constant 0 : index
    %19 = vector.load %arg1[%c0_21, %c0_22] : memref<64x256xbf16, #tpu.memory_space<vmem>>, vector<64x256xbf16>
    %20 = arith.extf %19 : vector<64x256xbf16> to vector<64x256xf32>
    %c0_23 = arith.constant 0 : index
    %c0_24 = arith.constant 0 : index
    %21 = vector.load %arg8[%c0_23, %c0_24] : memref<256x128xf32, #tpu.memory_space<vmem>>, vector<256x128xf32>
    %cst_25 = arith.constant dense<0.000000e+00> : vector<64x128xf32>
    %22 = tpu.matmul %20, %21, %cst_25 {dimension_numbers = #tpu.dot_dimension_numbers<[1], [0], [0], [1], [0, 0, 1, 1], [], []>} : vector<64x256xf32>, vector<256x128xf32>, vector<64x128xf32> -> vector<64x128xf32>
    %cst_26 = arith.constant dense<0.000000e+00> : vector<64xf32>
    %23 = vector.multi_reduction <add>, %22, %cst_26 [1] : vector<64x128xf32> to vector<64xf32>
    %24 = vector.shape_cast %23 : vector<64xf32> to vector<64x1xf32>
    %cst_27 = arith.constant 3.125000e-02 : f32
    %25 = vector.broadcast %cst_27 : f32 to vector<64x1xf32>
    %26 = arith.mulf %24, %25 : vector<64x1xf32>
    %27 = tpu.iota {dimensions = array<i32: 1>} : vector<64x128xi32>
    %c32_i32 = arith.constant 32 : i32
    %28 = vector.broadcast %c32_i32 : i32 to vector<64x128xi32>
    %29 = arith.cmpi slt, %27, %28 : vector<64x128xi32>
    %30 = vector.broadcast %26 : vector<64x1xf32> to vector<64x128xf32>
    %31 = arith.subf %22, %30 : vector<64x128xf32>
    %cst_28 = arith.constant 0.000000e+00 : f32
    %32 = vector.broadcast %cst_28 : f32 to vector<64x128xf32>
    %33 = arith.select %29, %31, %32 : vector<64x128xi1>, vector<64x128xf32>
    %34 = arith.mulf %33, %33 : vector<64x128xf32>
    %cst_29 = arith.constant dense<0.000000e+00> : vector<64xf32>
    %35 = vector.multi_reduction <add>, %34, %cst_29 [1] : vector<64x128xf32> to vector<64xf32>
    %36 = vector.shape_cast %35 : vector<64xf32> to vector<64x1xf32>
    %cst_30 = arith.constant 3.125000e-02 : f32
    %37 = vector.broadcast %cst_30 : f32 to vector<64x1xf32>
    %38 = arith.mulf %36, %37 : vector<64x1xf32>
    %cst_31 = arith.constant 9.99999974E-6 : f32
    %39 = vector.broadcast %cst_31 : f32 to vector<64x1xf32>
    %40 = arith.addf %38, %39 : vector<64x1xf32>
    %41 = math.rsqrt %40 : vector<64x1xf32>
    %42 = vector.broadcast %41 : vector<64x1xf32> to vector<64x128xf32>
    %43 = arith.mulf %33, %42 : vector<64x128xf32>
    %c0_32 = arith.constant 0 : index
    %c0_33 = arith.constant 0 : index
    %44 = vector.load %arg5[%c0_32, %c0_33] : memref<1x128xf32, #tpu.memory_space<vmem>>, vector<1x128xf32>
    %45 = vector.broadcast %44 : vector<1x128xf32> to vector<64x128xf32>
    %46 = arith.mulf %43, %45 : vector<64x128xf32>
    %c0_34 = arith.constant 0 : index
    %c0_35 = arith.constant 0 : index
    %47 = vector.load %arg6[%c0_34, %c0_35] : memref<1x128xf32, #tpu.memory_space<vmem>>, vector<1x128xf32>
    %48 = vector.broadcast %47 : vector<1x128xf32> to vector<64x128xf32>
    %49 = arith.addf %46, %48 : vector<64x128xf32>
    %50 = arith.addf %49, %2 : vector<64x128xf32>
    %c0_36 = arith.constant 0 : index
    %c0_37 = arith.constant 0 : index
    %51 = vector.load %arg7[%c0_36, %c0_37] : memref<64x128xf32, #tpu.memory_space<vmem>>, vector<64x128xf32>
    tpu.vector_store %arg7[%c0_36, %c0_37], %50 {strides = array<i32>} : memref<64x128xf32, #tpu.memory_space<vmem>>, vector<64x128xf32>,
    return
  }
  func.func @transform_0(%arg0: i32) -> (i32, i32) {
    %c0_i32 = arith.constant 0 : i32
    %c0_i32_0 = arith.constant 0 : i32
    %c0_i32_1 = arith.constant 0 : i32
    return %c0_i32, %c0_i32_0 : i32, i32
  }
  func.func @transform_1(%arg0: i32) -> (i32, i32) {
    %c0_i32 = arith.constant 0 : i32
    %c0_i32_0 = arith.constant 0 : i32
    %c0_i32_1 = arith.constant 0 : i32
    return %c0_i32, %c0_i32_0 : i32, i32
  }
  func.func @transform_2(%arg0: i32) -> (i32, i32, i32) {
    %c0_i32 = arith.constant 0 : i32
    %c0_i32_0 = arith.constant 0 : i32
    %c0_i32_1 = arith.constant 0 : i32
    %c0_i32_2 = arith.constant 0 : i32
    return %c0_i32, %c0_i32_0, %c0_i32_1 : i32, i32, i32
  }
  func.func @transform_3(%arg0: i32) -> (i32, i32) {
    %c0_i32 = arith.constant 0 : i32
    %c0_i32_0 = arith.constant 0 : i32
    %c0_i32_1 = arith.constant 0 : i32
    return %c0_i32, %c0_i32_0 : i32, i32
  }
  func.func @transform_4(%arg0: i32) -> (i32, i32) {
    %c0_i32 = arith.constant 0 : i32
    %c0_i32_0 = arith.constant 0 : i32
    %c0_i32_1 = arith.constant 0 : i32
    return %c0_i32, %c0_i32_0 : i32, i32
  }
  func.func @transform_5(%arg0: i32) -> (i32, i32) {
    %c0_i32 = arith.constant 0 : i32
    %c0_i32_0 = arith.constant 0 : i32
    %c0_i32_1 = arith.constant 0 : i32
    return %c0_i32, %c0_i32_0 : i32, i32
  }
  func.func @transform_6(%arg0: i32) -> (i32, i32) {
    %c0_i32 = arith.constant 0 : i32
    %c0_i32_0 = arith.constant 0 : i32
    %c0_i32_1 = arith.constant 0 : i32
    return %c0_i32, %c0_i32_0 : i32, i32
  }
}

</mosaic_0001>

<llo_original>
// kernel: tpu_custom_call.1
$region0: #{tpu_custom_call.1}
  #allocation0 [shape = 'u32[]', space=smem, size = 0x4, offset = 0x4, fixed_abs, tag = 'smem constant byte address 0x4 - core index']
  #allocation1 [shape = 'u32[144,128]{1,0:T(1,128)}', space=vmem, size = 0x12000, scoped, tag = 'internal scratch']
  #allocation2 [shape = 'f32[256,128]{1,0:T(8,128)}', space=vmem, size = 0x20000, scoped, tag = 'scratch operand']
  %s0 = inlined_call_operand.hbm [shape: bf16[64,256], index: 0, kind: input, shape index: {}]
  %s1 = inlined_call_operand.vmem [shape: bf16[64,32], index: 1, kind: input, shape index: {}]
  %s2 = inlined_call_operand.hbm [shape: bf16[4,32,128], index: 2, kind: input, shape index: {}]
  %s3 = inlined_call_operand.vmem [shape: bf16[32,128], index: 3, kind: input, shape index: {}]
  %s4 = inlined_call_operand.vmem [shape: f32[1,128], index: 4, kind: input, shape index: {}]
  %s5 = inlined_call_operand.vmem [shape: f32[1,128], index: 5, kind: input, shape index: {}]
  %s6 = inlined_call_operand.hbm [shape: f32[64,128], index: 6, kind: output, shape index: {}]
  %s7 = sld [smem:[#allocation0]]
  $region42: #{tpu_custom_call.1} parent=0
    _
  %s9 = ssub.s32 1, %s7
  %s10 = scalar_select 0, %s9, %s7
  $region1: #{tpu_custom_call.1} parent=0
    #allocation3 [shape = 'u8[32768]{0}', space=vmem, size = 0x8000, scoped, tag = 'input window, operand 0, single buffered']
    #allocation4 [shape = 's32[1]{0}', space=sflag, size = 0x4, scoped, tag = 'scoped memory for tpu_custom_call.1']
    #allocation5 [shape = 's32[1]{0}', space=sflag, size = 0x4, scoped, tag = 'scoped memory for tpu_custom_call.1']
    #allocation6 [shape = 'u8[32768]{0}', space=vmem, size = 0x8000, scoped, tag = 'input window, operand 2, single buffered']
    #allocation7 [shape = 's32[1]{0}', space=sflag, size = 0x4, scoped, tag = 'scoped memory for tpu_custom_call.1']
    #allocation8 [shape = 'u8[32768]{0}', space=vmem, size = 0x8000, scoped, tag = 'output window, operand 0, single buffered']
    %11 = vsyncpa [#allocation4], 0
    %12 = vsyncpa [#allocation7], 0
    %13 = vsyncpa [#allocation5], 0
    // Predicated region
    $region2: #{tpu_custom_call.1} parent=1 // pred_check
      _
    $region3: #{tpu_custom_call.1} parent=1 // pred_check_branch
      %15 = sbr.rel (0) target = $region5
    $region4: #{tpu_custom_call.1} parent=1 // pred_region
      %s17 = ssub.s32 1024, 1024
      %18 = vsyncadd [#allocation4], %s17
      %s19 = sshll.u32 [#allocation3], 4
      %s20 = int_to_ptr.vmem [resolvable:$true] %s19
      %25 = dma.hbm_to_vmem [thread:$0]  %s0, 1024, %s20, [#allocation4], 128, 128, 8
    $region5: #{tpu_custom_call.1} parent=1 // pred_fallthru
      _
    // Predicated region
    $region6: #{tpu_custom_call.1} parent=1 // pred_check
      _
    $region7: #{tpu_custom_call.1} parent=1 // pred_check_branch
      %27 = sbr.rel (0) target = $region9
    $region8: #{tpu_custom_call.1} parent=1 // pred_region
      _
    $region9: #{tpu_custom_call.1} parent=1 // pred_fallthru
      _
    // Predicated region
    $region10: #{tpu_custom_call.1} parent=1 // pred_check
      _
    $region11: #{tpu_custom_call.1} parent=1 // pred_check_branch
      %29 = sbr.rel (0) target = $region13
    $region12: #{tpu_custom_call.1} parent=1 // pred_region
      %s31 = ssub.s32 1024, 1024
      %32 = vsyncadd [#allocation7], %s31
      %s33 = sshll.u32 [#allocation6], 4
      %s34 = int_to_ptr.vmem [resolvable:$true] %s33
      %39 = dma.hbm_to_vmem [thread:$0]  %s2, 1024, %s34, [#allocation7], 64, 64, 4
    $region13: #{tpu_custom_call.1} parent=1 // pred_fallthru
      _
    // Predicated region
    $region14: #{tpu_custom_call.1} parent=1 // pred_check
      _
    $region15: #{tpu_custom_call.1} parent=1 // pred_check_branch
      %41 = sbr.rel (0) target = $region17
    $region16: #{tpu_custom_call.1} parent=1 // pred_region
      _
    $region17: #{tpu_custom_call.1} parent=1 // pred_fallthru
      _
    // Predicated region
    $region18: #{tpu_custom_call.1} parent=1 // pred_check
      _
    $region19: #{tpu_custom_call.1} parent=1 // pred_check_branch
      %43 = sbr.rel (0) target = $region21
    $region20: #{tpu_custom_call.1} parent=1 // pred_region
      _
    $region21: #{tpu_custom_call.1} parent=1 // pred_fallthru
      _
    // Predicated region
    $region22: #{tpu_custom_call.1} parent=1 // pred_check
      _
    $region23: #{tpu_custom_call.1} parent=1 // pred_check_branch
      %45 = sbr.rel (0) target = $region25
    $region24: #{tpu_custom_call.1} parent=1 // pred_region
      _
    $region25: #{tpu_custom_call.1} parent=1 // pred_fallthru
      _
    // Predicated region
    $region26: #{tpu_custom_call.1} parent=1 // pred_check
      _
    $region27: #{tpu_custom_call.1} parent=1 // pred_check_branch
      %47 = sbr.rel (0) target = $region29
    $region28: #{tpu_custom_call.1} parent=1 // pred_region
      %48 = dma.done [#allocation4], 1024
    $region29: #{tpu_custom_call.1} parent=1 // pred_fallthru
      _
    // Predicated region
    $region30: #{tpu_custom_call.1} parent=1 // pred_check
      _
    $region31: #{tpu_custom_call.1} parent=1 // pred_check_branch
      %50 = sbr.rel (0) target = $region33
    $region32: #{tpu_custom_call.1} parent=1 // pred_region
      %51 = dma.done [#allocation7], 1024
    $region33: #{tpu_custom_call.1} parent=1 // pred_fallthru
      _
    %v53 = vld [vmem:[%s1] sm:$0xf]
    %v54 = vld [vmem:[%s1 + $0x4] sm:$0xf]
    %v55 = vld [vmem:[%s1 + $0x8] sm:$0xf]
    %v56 = vld [vmem:[%s1 + $0xc] sm:$0xf]
    %v57 = vld [vmem:[%s1 + $0x10] sm:$0xf]
    %v58 = vld [vmem:[%s1 + $0x14] sm:$0xf]
    %v59 = vld [vmem:[%s1 + $0x18] sm:$0xf]
    %v60 = vld [vmem:[%s1 + $0x1c] sm:$0xf]
    %v61 = vld [vmem:[%s3] sm:$0xf]
    %v62 = vld [vmem:[%s3 + $0x4] sm:$0xf]
    %v63 = vld [vmem:[%s3 + $0x8] sm:$0xf]
    %v64 = vld [vmem:[%s3 + $0xc] sm:$0xf]
    %v73 = vunpack.c.l.b16 %v53
    %v74 = vunpack.c.l.b16 %v54
    %v75 = vunpack.c.l.b16 %v55
    %v76 = vunpack.c.l.b16 %v56
    %v77 = vunpack.c.l.b16 %v57
    %v78 = vunpack.c.l.b16 %v58
    %v79 = vunpack.c.l.b16 %v59
    %v80 = vunpack.c.l.b16 %v60
    %v81 = vpack.c.b16 %v74, %v73
    %v82 = vpack.c.b16 %v76, %v75
    %v83 = vpack.c.b16 %v78, %v77
    %v84 = vpack.c.b16 %v80, %v79
    %v89 = vunpack.c.l.b16 %v61
    %v90 = vunpack.c.l.b16 %v62
    %v91 = vunpack.c.l.b16 %v63
    %v92 = vunpack.c.l.b16 %v64
    %v93 = vpack.c.b16 %v90, %v89
    %v94 = vpack.c.b16 %v92, %v91
    %vm97 = vcmask 261120
    %v99 = vsel %vm97, %v81, 0
    %v102 = vsel %vm97, %v82, 0
    %v105 = vsel %vm97, %v83, 0
    %v108 = vsel %vm97, %v84, 0
    %110 = vmatprep.subr.bf16.mxu0 0
    %111 = vmatpush1.bf16.msra.mxu0 %v93
    %112 = vmatprep.subr.bf16.mxu0 0
    %113 = vmatpush1.bf16.msra.mxu0 %v94
    %114 = vmatprep.subr.bf16.mxu0 0
    %115 = vmatpush1.bf16.msra.mxu0 0
    %116 = vmatprep.subr.bf16.mxu0 0
    %117 = vmatpush1.bf16.msra.mxu0 0
    %118 = vmatprep.subr.bf16.mxu0 0
    %119 = vmatpush1.bf16.msra.mxu0 0
    %120 = vmatprep.subr.bf16.mxu0 0
    %121 = vmatpush1.bf16.msra.mxu0 0
    %122 = vmatprep.subr.bf16.mxu0 0
    %123 = vmatpush1.bf16.msra.mxu0 0
    %124 = vmatprep.subr.bf16.mxu0 0
    %125 = vmatpush1.bf16.msra.mxu0 0
    %126 = vmatprep.subr.bf16.mxu0 0
    %127 = vmatpush1.bf16.msra.mxu0 0
    %128 = vmatprep.subr.bf16.mxu0 0
    %129 = vmatpush1.bf16.msra.mxu0 0
    %130 = vmatprep.subr.bf16.mxu0 0
    %131 = vmatpush1.bf16.msra.mxu0 0
    %132 = vmatprep.subr.bf16.mxu0 0
    %133 = vmatpush1.bf16.msra.mxu0 0
    %134 = vmatprep.subr.bf16.mxu0 0
    %135 = vmatpush1.bf16.msra.mxu0 0
    %136 = vmatprep.subr.bf16.mxu0 0
    %137 = vmatpush1.bf16.msra.mxu0 0
    %138 = vmatprep.subr.bf16.mxu0 0
    %139 = vmatpush1.bf16.msra.mxu0 0
    %140 = vmatprep.subr.bf16.mxu0 0
    %141 = vmatpush1.bf16.msra.mxu0 0
    %142 = vmatprep.mubr.bf16.mxu0 0
    %143 = vmatmul.mubr.bf16.gmra.mrb[0].mxu0 %v99
    %v144 = vpop.f32.mrb[0].mxu0
    %v145 = vadd.f32 0.0, %v144
    %v146 = vpop.f32.mrb[0].mxu0
    %v147 = vpop.f32.mrb[0].mxu0
    %v148 = vadd.f32 0.0, %v147
    %v149 = vpop.f32.mrb[0].mxu0
    %150 = vmatprep.mubr.bf16.mxu0 0
    %151 = vmatmul.mubr.bf16.gmra.mrb[0].mxu0 %v102
    %v152 = vpop.f32.mrb[0].mxu0
    %v153 = vadd.f32 0.0, %v152
    %v154 = vpop.f32.mrb[0].mxu0
    %v155 = vpop.f32.mrb[0].mxu0
    %v156 = vadd.f32 0.0, %v155
    %v157 = vpop.f32.mrb[0].mxu0
    %158 = vmatprep.mubr.bf16.mxu0 0
    %159 = vmatmul.mubr.bf16.gmra.mrb[0].mxu0 %v105
    %v160 = vpop.f32.mrb[0].mxu0
    %v161 = vadd.f32 0.0, %v160
    %v162 = vpop.f32.mrb[0].mxu0
    %v163 = vpop.f32.mrb[0].mxu0
    %v164 = vadd.f32 0.0, %v163
    %v165 = vpop.f32.mrb[0].mxu0
    %166 = vmatprep.mubr.bf16.mxu0 0
    %167 = vmatmul.mubr.bf16.gmra.mrb[0].mxu0 %v108
    %v168 = vpop.f32.mrb[0].mxu0
    %v169 = vadd.f32 0.0, %v168
    %v170 = vpop.f32.mrb[0].mxu0
    %v171 = vpop.f32.mrb[0].mxu0
    %v172 = vadd.f32 0.0, %v171
    %v173 = vpop.f32.mrb[0].mxu0
    %174 = vdwg.mxu0
    %v175 = vld [vmem:[#allocation6] sm:$0xf]
    %v176 = vld [vmem:[#allocation6 + $0x4] sm:$0xf]
    %v177 = vld [vmem:[#allocation6 + $0x8] sm:$0xf]
    %v178 = vld [vmem:[#allocation6 + $0xc] sm:$0xf]
    %v183 = vunpack.c.l.b16 %v175
    %v184 = vunpack.c.l.b16 %v176
    %v185 = vunpack.c.l.b16 %v177
    %v186 = vunpack.c.l.b16 %v178
    %v187 = vpack.c.b16 %v184, %v183
    %v188 = vpack.c.b16 %v186, %v185
    %191 = vmatprep.subr.bf16.mxu0 0
    %192 = vmatpush1.bf16.msra.mxu0 %v187
    %193 = vmatprep.subr.bf16.mxu0 0
    %194 = vmatpush1.bf16.msra.mxu0 %v188
    %195 = vmatprep.subr.bf16.mxu0 0
    %196 = vmatpush1.bf16.msra.mxu0 0
    %197 = vmatprep.subr.bf16.mxu0 0
    %198 = vmatpush1.bf16.msra.mxu0 0
    %199 = vmatprep.subr.bf16.mxu0 0
    %200 = vmatpush1.bf16.msra.mxu0 0
    %201 = vmatprep.subr.bf16.mxu0 0
    %202 = vmatpush1.bf16.msra.mxu0 0
    %203 = vmatprep.subr.bf16.mxu0 0
    %204 = vmatpush1.bf16.msra.mxu0 0
    %205 = vmatprep.subr.bf16.mxu0 0
    %206 = vmatpush1.bf16.msra.mxu0 0
    %207 = vmatprep.subr.bf16.mxu0 0
    %208 = vmatpush1.bf16.msra.mxu0 0
    %209 = vmatprep.subr.bf16.mxu0 0
    %210 = vmatpush1.bf16.msra.mxu0 0
    %211 = vmatprep.subr.bf16.mxu0 0
    %212 = vmatpush1.bf16.msra.mxu0 0
    %213 = vmatprep.subr.bf16.mxu0 0
    %214 = vmatpush1.bf16.msra.mxu0 0
    %215 = vmatprep.subr.bf16.mxu0 0
    %216 = vmatpush1.bf16.msra.mxu0 0
    %217 = vmatprep.subr.bf16.mxu0 0
    %218 = vmatpush1.bf16.msra.mxu0 0
    %219 = vmatprep.subr.bf16.mxu0 0
    %220 = vmatpush1.bf16.msra.mxu0 0
    %221 = vmatprep.subr.bf16.mxu0 0
    %222 = vmatpush1.bf16.msra.mxu0 0
    %223 = vmatprep.mubr.bf16.mxu0 0
    %224 = vmatmul.mubr.bf16.gmra.mrb[0].mxu0 %v99
    %v225 = vpop.f32.mrb[0].mxu0
    %v226 = vadd.f32 0.0, %v225
    %v227 = vpop.f32.mrb[0].mxu0
    %v228 = vpop.f32.mrb[0].mxu0
    %v229 = vadd.f32 0.0, %v228
    %v230 = vpop.f32.mrb[0].mxu0
    %231 = vmatprep.mubr.bf16.mxu0 0
    %232 = vmatmul.mubr.bf16.gmra.mrb[0].mxu0 %v102
    %v233 = vpop.f32.mrb[0].mxu0
    %v234 = vadd.f32 0.0, %v233
    %v235 = vpop.f32.mrb[0].mxu0
    %v236 = vpop.f32.mrb[0].mxu0
    %v237 = vadd.f32 0.0, %v236
    %v238 = vpop.f32.mrb[0].mxu0
    %239 = vmatprep.mubr.bf16.mxu0 0
    %240 = vmatmul.mubr.bf16.gmra.mrb[0].mxu0 %v105
    %v241 = vpop.f32.mrb[0].mxu0
    %v242 = vadd.f32 0.0, %v241
    %v243 = vpop.f32.mrb[0].mxu0
    %v244 = vpop.f32.mrb[0].mxu0
    %v245 = vadd.f32 0.0, %v244
    %v246 = vpop.f32.mrb[0].mxu0
    %247 = vmatprep.mubr.bf16.mxu0 0
    %248 = vmatmul.mubr.bf16.gmra.mrb[0].mxu0 %v108
    %v249 = vpop.f32.mrb[0].mxu0
    %v250 = vadd.f32 0.0, %v249
    %v251 = vpop.f32.mrb[0].mxu0
    %v252 = vpop.f32.mrb[0].mxu0
    %v253 = vadd.f32 0.0, %v252
    %v254 = vpop.f32.mrb[0].mxu0
    %255 = vdwg.mxu0
    %256 = vst [vmem:[#allocation2] sm:$0xff] %v226
    %257 = vst [vmem:[#allocation2 + $0x8] sm:$0xff] %v229
    %258 = vst [vmem:[#allocation2 + $0x10] sm:$0xff] %v234
    %259 = vst [vmem:[#allocation2 + $0x18] sm:$0xff] %v237
    %260 = vst [vmem:[#allocation2 + $0x20] sm:$0xff] %v242
    %261 = vst [vmem:[#allocation2 + $0x28] sm:$0xff] %v245
    %262 = vst [vmem:[#allocation2 + $0x30] sm:$0xff] %v250
    %263 = vst [vmem:[#allocation2 + $0x38] sm:$0xff] %v253
    %s264 = scalar_lea.vmem [#allocation6], 16
    %v265 = vld [vmem:[%s264] sm:$0xf]
    %v266 = vld [vmem:[%s264 + $0x4] sm:$0xf]
    %v267 = vld [vmem:[%s264 + $0x8] sm:$0xf]
    %v268 = vld [vmem:[%s264 + $0xc] sm:$0xf]
    %v273 = vunpack.c.l.b16 %v265
    %v274 = vunpack.c.l.b16 %v266
    %v275 = vunpack.c.l.b16 %v267
    %v276 = vunpack.c.l.b16 %v268
    %v277 = vpack.c.b16 %v274, %v273
    %v278 = vpack.c.b16 %v276, %v275
    %281 = vmatprep.subr.bf16.mxu0 0
    %282 = vmatpush1.bf16.msra.mxu0 %v277
    %283 = vmatprep.subr.bf16.mxu0 0
    %284 = vmatpush1.bf16.msra.mxu0 %v278
    %285 = vmatprep.subr.bf16.mxu0 0
    %286 = vmatpush1.bf16.msra.mxu0 0
    %287 = vmatprep.subr.bf16.mxu0 0
    %288 = vmatpush1.bf16.msra.mxu0 0
    %289 = vmatprep.subr.bf16.mxu0 0
    %290 = vmatpush1.bf16.msra.mxu0 0
    %291 = vmatprep.subr.bf16.mxu0 0
    %292 = vmatpush1.bf16.msra.mxu0 0
    %293 = vmatprep.subr.bf16.mxu0 0
    %294 = vmatpush1.bf16.msra.mxu0 0
    %295 = vmatprep.subr.bf16.mxu0 0
    %296 = vmatpush1.bf16.msra.mxu0 0
    %297 = vmatprep.subr.bf16.mxu0 0
    %298 = vmatpush1.bf16.msra.mxu0 0
    %299 = vmatprep.subr.bf16.mxu0 0
    %300 = vmatpush1.bf16.msra.mxu0 0
    %301 = vmatprep.subr.bf16.mxu0 0
    %302 = vmatpush1.bf16.msra.mxu0 0
    %303 = vmatprep.subr.bf16.mxu0 0
    %304 = vmatpush1.bf16.msra.mxu0 0
    %305 = vmatprep.subr.bf16.mxu0 0
    %306 = vmatpush1.bf16.msra.mxu0 0
    %307 = vmatprep.subr.bf16.mxu0 0
    %308 = vmatpush1.bf16.msra.mxu0 0
    %309 = vmatprep.subr.bf16.mxu0 0
    %310 = vmatpush1.bf16.msra.mxu0 0
    %311 = vmatprep.subr.bf16.mxu0 0
    %312 = vmatpush1.bf16.msra.mxu0 0
    %313 = vmatprep.mubr.bf16.mxu0 0
    %314 = vmatmul.mubr.bf16.gmra.mrb[0].mxu0 %v99
    %v315 = vpop.f32.mrb[0].mxu0
    %v316 = vadd.f32 0.0, %v315
    %v317 = vpop.f32.mrb[0].mxu0
    %v318 = vpop.f32.mrb[0].mxu0
    %v319 = vadd.f32 0.0, %v318
    %v320 = vpop.f32.mrb[0].mxu0
    %321 = vmatprep.mubr.bf16.mxu0 0
    %322 = vmatmul.mubr.bf16.gmra.mrb[0].mxu0 %v102
    %v323 = vpop.f32.mrb[0].mxu0
    %v324 = vadd.f32 0.0, %v323
    %v325 = vpop.f32.mrb[0].mxu0
    %v326 = vpop.f32.mrb[0].mxu0
    %v327 = vadd.f32 0.0, %v326
    %v328 = vpop.f32.mrb[0].mxu0
    %329 = vmatprep.mubr.bf16.mxu0 0
    %330 = vmatmul.mubr.bf16.gmra.mrb[0].mxu0 %v105
    %v331 = vpop.f32.mrb[0].mxu0
    %v332 = vadd.f32 0.0, %v331
    %v333 = vpop.f32.mrb[0].mxu0
    %v334 = vpop.f32.mrb[0].mxu0
    %v335 = vadd.f32 0.0, %v334
    %v336 = vpop.f32.mrb[0].mxu0
    %337 = vmatprep.mubr.bf16.mxu0 0
    %338 = vmatmul.mubr.bf16.gmra.mrb[0].mxu0 %v108
    %v339 = vpop.f32.mrb[0].mxu0
    %v340 = vadd.f32 0.0, %v339
    %v341 = vpop.f32.mrb[0].mxu0
    %v342 = vpop.f32.mrb[0].mxu0
    %v343 = vadd.f32 0.0, %v342
    %v344 = vpop.f32.mrb[0].mxu0
    %345 = vdwg.mxu0
    %346 = vst [vmem:[#allocation2 + $0x40] sm:$0xff] %v316
    %347 = vst [vmem:[#allocation2 + $0x48] sm:$0xff] %v319
    %348 = vst [vmem:[#allocation2 + $0x50] sm:$0xff] %v324
    %349 = vst [vmem:[#allocation2 + $0x58] sm:$0xff] %v327
    %350 = vst [vmem:[#allocation2 + $0x60] sm:$0xff] %v332
    %351 = vst [vmem:[#allocation2 + $0x68] sm:$0xff] %v335
    %352 = vst [vmem:[#allocation2 + $0x70] sm:$0xff] %v340
    %353 = vst [vmem:[#allocation2 + $0x78] sm:$0xff] %v343
    %s354 = scalar_lea.vmem [#allocation6], 32
    %v355 = vld [vmem:[%s354] sm:$0xf]
    %v356 = vld [vmem:[%s354 + $0x4] sm:$0xf]
    %v357 = vld [vmem:[%s354 + $0x8] sm:$0xf]
    %v358 = vld [vmem:[%s354 + $0xc] sm:$0xf]
    %v363 = vunpack.c.l.b16 %v355
    %v364 = vunpack.c.l.b16 %v356
    %v365 = vunpack.c.l.b16 %v357
    %v366 = vunpack.c.l.b16 %v358
    %v367 = vpack.c.b16 %v364, %v363
    %v368 = vpack.c.b16 %v366, %v365
    %371 = vmatprep.subr.bf16.mxu0 0
    %372 = vmatpush1.bf16.msra.mxu0 %v367
    %373 = vmatprep.subr.bf16.mxu0 0
    %374 = vmatpush1.bf16.msra.mxu0 %v368
    %375 = vmatprep.subr.bf16.mxu0 0
    %376 = vmatpush1.bf16.msra.mxu0 0
    %377 = vmatprep.subr.bf16.mxu0 0
    %378 = vmatpush1.bf16.msra.mxu0 0
    %379 = vmatprep.subr.bf16.mxu0 0
    %380 = vmatpush1.bf16.msra.mxu0 0
    %381 = vmatprep.subr.bf16.mxu0 0
    %382 = vmatpush1.bf16.msra.mxu0 0
    %383 = vmatprep.subr.bf16.mxu0 0
    %384 = vmatpush1.bf16.msra.mxu0 0
    %385 = vmatprep.subr.bf16.mxu0 0
    %386 = vmatpush1.bf16.msra.mxu0 0
    %387 = vmatprep.subr.bf16.mxu0 0
    %388 = vmatpush1.bf16.msra.mxu0 0
    %389 = vmatprep.subr.bf16.mxu0 0
    %390 = vmatpush1.bf16.msra.mxu0 0
    %391 = vmatprep.subr.bf16.mxu0 0
    %392 = vmatpush1.bf16.msra.mxu0 0
    %393 = vmatprep.subr.bf16.mxu0 0
    %394 = vmatpush1.bf16.msra.mxu0 0
    %395 = vmatprep.subr.bf16.mxu0 0
    %396 = vmatpush1.bf16.msra.mxu0 0
    %397 = vmatprep.subr.bf16.mxu0 0
    %398 = vmatpush1.bf16.msra.mxu0 0
    %399 = vmatprep.subr.bf16.mxu0 0
    %400 = vmatpush1.bf16.msra.mxu0 0
    %401 = vmatprep.subr.bf16.mxu0 0
    %402 = vmatpush1.bf16.msra.mxu0 0
    %403 = vmatprep.mubr.bf16.mxu0 0
    %404 = vmatmul.mubr.bf16.gmra.mrb[0].mxu0 %v99
    %v405 = vpop.f32.mrb[0].mxu0
    %v406 = vadd.f32 0.0, %v405
    %v407 = vpop.f32.mrb[0].mxu0
    %v408 = vpop.f32.mrb[0].mxu0
    %v409 = vadd.f32 0.0, %v408
    %v410 = vpop.f32.mrb[0].mxu0
    %411 = vmatprep.mubr.bf16.mxu0 0
    %412 = vmatmul.mubr.bf16.gmra.mrb[0].mxu0 %v102
    %v413 = vpop.f32.mrb[0].mxu0
    %v414 = vadd.f32 0.0, %v413
    %v415 = vpop.f32.mrb[0].mxu0
    %v416 = vpop.f32.mrb[0].mxu0
    %v417 = vadd.f32 0.0, %v416
    %v418 = vpop.f32.mrb[0].mxu0
    %419 = vmatprep.mubr.bf16.mxu0 0
    %420 = vmatmul.mubr.bf16.gmra.mrb[0].mxu0 %v105
    %v421 = vpop.f32.mrb[0].mxu0
    %v422 = vadd.f32 0.0, %v421
    %v423 = vpop.f32.mrb[0].mxu0
    %v424 = vpop.f32.mrb[0].mxu0
    %v425 = vadd.f32 0.0, %v424
    %v426 = vpop.f32.mrb[0].mxu0
    %427 = vmatprep.mubr.bf16.mxu0 0
    %428 = vmatmul.mubr.bf16.gmra.mrb[0].mxu0 %v108
    %v429 = vpop.f32.mrb[0].mxu0
    %v430 = vadd.f32 0.0, %v429
    %v431 = vpop.f32.mrb[0].mxu0
    %v432 = vpop.f32.mrb[0].mxu0
    %v433 = vadd.f32 0.0, %v432
    %v434 = vpop.f32.mrb[0].mxu0
    %435 = vdwg.mxu0
    %436 = vst [vmem:[#allocation2 + $0x80] sm:$0xff] %v406
    %437 = vst [vmem:[#allocation2 + $0x88] sm:$0xff] %v409
    %438 = vst [vmem:[#allocation2 + $0x90] sm:$0xff] %v414
    %439 = vst [vmem:[#allocation2 + $0x98] sm:$0xff] %v417
    %440 = vst [vmem:[#allocation2 + $0xa0] sm:$0xff] %v422
    %441 = vst [vmem:[#allocation2 + $0xa8] sm:$0xff] %v425
    %442 = vst [vmem:[#allocation2 + $0xb0] sm:$0xff] %v430
    %443 = vst [vmem:[#allocation2 + $0xb8] sm:$0xff] %v433
    %s444 = scalar_lea.vmem [#allocation6], 48
    %v445 = vld [vmem:[%s444] sm:$0xf]
    %v446 = vld [vmem:[%s444 + $0x4] sm:$0xf]
    %v447 = vld [vmem:[%s444 + $0x8] sm:$0xf]
    %v448 = vld [vmem:[%s444 + $0xc] sm:$0xf]
    %v453 = vunpack.c.l.b16 %v445
    %v454 = vunpack.c.l.b16 %v446
    %v455 = vunpack.c.l.b16 %v447
    %v456 = vunpack.c.l.b16 %v448
    %v457 = vpack.c.b16 %v454, %v453
    %v458 = vpack.c.b16 %v456, %v455
    %461 = vmatprep.subr.bf16.mxu0 0
    %462 = vmatpush1.bf16.msra.mxu0 %v457
    %463 = vmatprep.subr.bf16.mxu0 0
    %464 = vmatpush1.bf16.msra.mxu0 %v458
    %465 = vmatprep.subr.bf16.mxu0 0
    %466 = vmatpush1.bf16.msra.mxu0 0
    %467 = vmatprep.subr.bf16.mxu0 0
    %468 = vmatpush1.bf16.msra.mxu0 0
    %469 = vmatprep.subr.bf16.mxu0 0
    %470 = vmatpush1.bf16.msra.mxu0 0
    %471 = vmatprep.subr.bf16.mxu0 0
    %472 = vmatpush1.bf16.msra.mxu0 0
    %473 = vmatprep.subr.bf16.mxu0 0
    %474 = vmatpush1.bf16.msra.mxu0 0
    %475 = vmatprep.subr.bf16.mxu0 0
    %476 = vmatpush1.bf16.msra.mxu0 0
    %477 = vmatprep.subr.bf16.mxu0 0
    %478 = vmatpush1.bf16.msra.mxu0 0
    %479 = vmatprep.subr.bf16.mxu0 0
    %480 = vmatpush1.bf16.msra.mxu0 0
    %481 = vmatprep.subr.bf16.mxu0 0
    %482 = vmatpush1.bf16.msra.mxu0 0
    %483 = vmatprep.subr.bf16.mxu0 0
    %484 = vmatpush1.bf16.msra.mxu0 0
    %485 = vmatprep.subr.bf16.mxu0 0
    %486 = vmatpush1.bf16.msra.mxu0 0
    %487 = vmatprep.subr.bf16.mxu0 0
    %488 = vmatpush1.bf16.msra.mxu0 0
    %489 = vmatprep.subr.bf16.mxu0 0
    %490 = vmatpush1.bf16.msra.mxu0 0
    %491 = vmatprep.subr.bf16.mxu0 0
    %492 = vmatpush1.bf16.msra.mxu0 0
    %493 = vmatprep.mubr.bf16.mxu0 0
    %494 = vmatmul.mubr.bf16.gmra.mrb[0].mxu0 %v99
    %v495 = vpop.f32.mrb[0].mxu0
    %v496 = vadd.f32 0.0, %v495
    %v497 = vpop.f32.mrb[0].mxu0
    %v498 = vpop.f32.mrb[0].mxu0
    %v499 = vadd.f32 0.0, %v498
    %v500 = vpop.f32.mrb[0].mxu0
    %501 = vmatprep.mubr.bf16.mxu0 0
    %502 = vmatmul.mubr.bf16.gmra.mrb[0].mxu0 %v102
    %v503 = vpop.f32.mrb[0].mxu0
    %v504 = vadd.f32 0.0, %v503
    %v505 = vpop.f32.mrb[0].mxu0
    %v506 = vpop.f32.mrb[0].mxu0
    %v507 = vadd.f32 0.0, %v506
    %v508 = vpop.f32.mrb[0].mxu0
    %509 = vmatprep.mubr.bf16.mxu0 0
    %510 = vmatmul.mubr.bf16.gmra.mrb[0].mxu0 %v105
    %v511 = vpop.f32.mrb[0].mxu0
    %v512 = vadd.f32 0.0, %v511
    %v513 = vpop.f32.mrb[0].mxu0
    %v514 = vpop.f32.mrb[0].mxu0
    %v515 = vadd.f32 0.0, %v514
    %v516 = vpop.f32.mrb[0].mxu0
    %517 = vmatprep.mubr.bf16.mxu0 0
    %518 = vmatmul.mubr.bf16.gmra.mrb[0].mxu0 %v108
    %v519 = vpop.f32.mrb[0].mxu0
    %v520 = vadd.f32 0.0, %v519
    %v521 = vpop.f32.mrb[0].mxu0
    %v522 = vpop.f32.mrb[0].mxu0
    %v523 = vadd.f32 0.0, %v522
    %v524 = vpop.f32.mrb[0].mxu0
    %525 = vdwg.mxu0
    %526 = vst [vmem:[#allocation2 + $0xc0] sm:$0xff] %v496
    %527 = vst [vmem:[#allocation2 + $0xc8] sm:$0xff] %v499
    %528 = vst [vmem:[#allocation2 + $0xd0] sm:$0xff] %v504
    %529 = vst [vmem:[#allocation2 + $0xd8] sm:$0xff] %v507
    %530 = vst [vmem:[#allocation2 + $0xe0] sm:$0xff] %v512
    %531 = vst [vmem:[#allocation2 + $0xe8] sm:$0xff] %v515
    %532 = vst [vmem:[#allocation2 + $0xf0] sm:$0xff] %v520
    %533 = vst [vmem:[#allocation2 + $0xf8] sm:$0xff] %v523
    %v534 = vld [vmem:[#allocation3] sm:$0xff]
    %v535 = vld [vmem:[#allocation3 + $0x8] sm:$0xff]
    %v536 = vld [vmem:[#allocation3 + $0x10] sm:$0xff]
    %v537 = vld [vmem:[#allocation3 + $0x18] sm:$0xff]
    %v538 = vld [vmem:[#allocation3 + $0x20] sm:$0xff]
    %v539 = vld [vmem:[#allocation3 + $0x28] sm:$0xff]
    %v540 = vld [vmem:[#allocation3 + $0x30] sm:$0xff]
    %v541 = vld [vmem:[#allocation3 + $0x38] sm:$0xff]
    %v542 = vunpack.c.l.bf16 %v534
    %v543 = vunpack.c.h.bf16 %v534
    %v544 = vunpack.c.l.bf16 %v535
    %v545 = vunpack.c.h.bf16 %v535
    %v546 = vunpack.c.l.bf16 %v536
    %v547 = vunpack.c.h.bf16 %v536
    %v548 = vunpack.c.l.bf16 %v537
    %v549 = vunpack.c.h.bf16 %v537
    %v550 = vunpack.c.l.bf16 %v538
    %v551 = vunpack.c.h.bf16 %v538
    %v552 = vunpack.c.l.bf16 %v539
    %v553 = vunpack.c.h.bf16 %v539
    %v554 = vunpack.c.l.bf16 %v540
    %v555 = vunpack.c.h.bf16 %v540
    %v556 = vunpack.c.l.bf16 %v541
    %v557 = vunpack.c.h.bf16 %v541
    %v558 = vld [vmem:[#allocation2] sm:$0xff]
    %v559 = vld [vmem:[#allocation2 + $0x8] sm:$0xff]
    %v560 = vld [vmem:[#allocation2 + $0x10] sm:$0xff]
    %v561 = vld [vmem:[#allocation2 + $0x18] sm:$0xff]
    %v562 = vld [vmem:[#allocation2 + $0x20] sm:$0xff]
    %v563 = vld [vmem:[#allocation2 + $0x28] sm:$0xff]
    %v564 = vld [vmem:[#allocation2 + $0x30] sm:$0xff]
    %v565 = vld [vmem:[#allocation2 + $0x38] sm:$0xff]
    %v566 = vld [vmem:[#allocation2 + $0x40] sm:$0xff]
    %v567 = vld [vmem:[#allocation2 + $0x48] sm:$0xff]
    %v568 = vld [vmem:[#allocation2 + $0x50] sm:$0xff]
    %v569 = vld [vmem:[#allocation2 + $0x58] sm:$0xff]
    %v570 = vld [vmem:[#allocation2 + $0x60] sm:$0xff]
    %v571 = vld [vmem:[#allocation2 + $0x68] sm:$0xff]
    %v572 = vld [vmem:[#allocation2 + $0x70] sm:$0xff]
    %v573 = vld [vmem:[#allocation2 + $0x78] sm:$0xff]
    %v574 = vld [vmem:[#allocation2 + $0x80] sm:$0xff]
    %v575 = vld [vmem:[#allocation2 + $0x88] sm:$0xff]
    %v576 = vld [vmem:[#allocation2 + $0x90] sm:$0xff]
    %v577 = vld [vmem:[#allocation2 + $0x98] sm:$0xff]
    %v578 = vld [vmem:[#allocation2 + $0xa0] sm:$0xff]
    %v579 = vld [vmem:[#allocation2 + $0xa8] sm:$0xff]
    %v580 = vld [vmem:[#allocation2 + $0xb0] sm:$0xff]
    %v581 = vld [vmem:[#allocation2 + $0xb8] sm:$0xff]
    %v582 = vld [vmem:[#allocation2 + $0xc0] sm:$0xff]
    %v583 = vld [vmem:[#allocation2 + $0xc8] sm:$0xff]
    %v584 = vld [vmem:[#allocation2 + $0xd0] sm:$0xff]
    %v585 = vld [vmem:[#allocation2 + $0xd8] sm:$0xff]
    %v586 = vld [vmem:[#allocation2 + $0xe0] sm:$0xff]
    %v587 = vld [vmem:[#allocation2 + $0xe8] sm:$0xff]
    %v588 = vld [vmem:[#allocation2 + $0xf0] sm:$0xff]
    %v589 = vld [vmem:[#allocation2 + $0xf8] sm:$0xff]
    %590 = vmatprep.subr.mxu0 0.0
    %591 = vmatpush1.msra.mxu0 %v558
    %592 = vmatprep.subr.mxu0 0.0
    %593 = vmatpush1.msra.mxu0 %v559
    %594 = vmatprep.subr.mxu0 0.0
    %595 = vmatpush1.msra.mxu0 %v560
    %596 = vmatprep.subr.mxu0 0.0
    %597 = vmatpush1.msra.mxu0 %v561
    %598 = vmatprep.subr.mxu0 0.0
    %599 = vmatpush1.msra.mxu0 %v562
    %600 = vmatprep.subr.mxu0 0.0
    %601 = vmatpush1.msra.mxu0 %v563
    %602 = vmatprep.subr.mxu0 0.0
    %603 = vmatpush1.msra.mxu0 %v564
    %604 = vmatprep.subr.mxu0 0.0
    %605 = vmatpush1.msra.mxu0 %v565
    %606 = vmatprep.subr.mxu0 0.0
    %607 = vmatpush1.msra.mxu0 %v566
    %608 = vmatprep.subr.mxu0 0.0
    %609 = vmatpush1.msra.mxu0 %v567
    %610 = vmatprep.subr.mxu0 0.0
    %611 = vmatpush1.msra.mxu0 %v568
    %612 = vmatprep.subr.mxu0 0.0
    %613 = vmatpush1.msra.mxu0 %v569
    %614 = vmatprep.subr.mxu0 0.0
    %615 = vmatpush1.msra.mxu0 %v570
    %616 = vmatprep.subr.mxu0 0.0
    %617 = vmatpush1.msra.mxu0 %v571
    %618 = vmatprep.subr.mxu0 0.0
    %619 = vmatpush1.msra.mxu0 %v572
    %620 = vmatprep.subr.mxu0 0.0
    %621 = vmatpush1.msra.mxu0 %v573
    %622 = vmatprep.subr.mxu0 0.0
    %623 = vmatpush1.msra.mxu0 %v574
    %624 = vmatprep.subr.mxu0 0.0
    %625 = vmatpush1.msra.mxu0 %v575
    %626 = vmatprep.subr.mxu0 0.0
    %627 = vmatpush1.msra.mxu0 %v576
    %628 = vmatprep.subr.mxu0 0.0
    %629 = vmatpush1.msra.mxu0 %v577
    %630 = vmatprep.subr.mxu0 0.0
    %631 = vmatpush1.msra.mxu0 %v578
    %632 = vmatprep.subr.mxu0 0.0
    %633 = vmatpush1.msra.mxu0 %v579
    %634 = vmatprep.subr.mxu0 0.0
    %635 = vmatpush1.msra.mxu0 %v580
    %636 = vmatprep.subr.mxu0 0.0
    %637 = vmatpush1.msra.mxu0 %v581
    %638 = vmatprep.subr.mxu0 0.0
    %639 = vmatpush1.msra.mxu0 %v582
    %640 = vmatprep.subr.mxu0 0.0
    %641 = vmatpush1.msra.mxu0 %v583
    %642 = vmatprep.subr.mxu0 0.0
    %643 = vmatpush1.msra.mxu0 %v584
    %644 = vmatprep.subr.mxu0 0.0
    %645 = vmatpush1.msra.mxu0 %v585
    %646 = vmatprep.subr.mxu0 0.0
    %647 = vmatpush1.msra.mxu0 %v586
    %648 = vmatprep.subr.mxu0 0.0
    %649 = vmatpush1.msra.mxu0 %v587
    %650 = vmatprep.subr.mxu0 0.0
    %651 = vmatpush1.msra.mxu0 %v588
    %652 = vmatprep.subr.mxu0 0.0
    %653 = vmatpush1.msra.mxu0 %v589
    %654 = vmatprep.mubr.f32.mxu0 %v543
    %655 = vmatmul.mubr.f32.gmra.mrb[0].mxu0 %v542
    %v656 = vpop.f32.mrb[0].mxu0
    %v657 = vadd.f32 0.0, %v656
    %v658 = vpop.f32.mrb[0].mxu0
    %659 = vmatprep.mubr.f32.mxu0 %v545
    %660 = vmatmul.mubr.f32.gmra.mrb[0].mxu0 %v544
    %v661 = vpop.f32.mrb[0].mxu0
    %v662 = vadd.f32 0.0, %v661
    %v663 = vpop.f32.mrb[0].mxu0
    %664 = vmatprep.mubr.f32.mxu0 %v547
    %665 = vmatmul.mubr.f32.gmra.mrb[0].mxu0 %v546
    %v666 = vpop.f32.mrb[0].mxu0
    %v667 = vadd.f32 0.0, %v666
    %v668 = vpop.f32.mrb[0].mxu0
    %669 = vmatprep.mubr.f32.mxu0 %v549
    %670 = vmatmul.mubr.f32.gmra.mrb[0].mxu0 %v548
    %v671 = vpop.f32.mrb[0].mxu0
    %v672 = vadd.f32 0.0, %v671
    %v673 = vpop.f32.mrb[0].mxu0
    %674 = vmatprep.mubr.f32.mxu0 %v551
    %675 = vmatmul.mubr.f32.gmra.mrb[0].mxu0 %v550
    %v676 = vpop.f32.mrb[0].mxu0
    %v677 = vadd.f32 0.0, %v676
    %v678 = vpop.f32.mrb[0].mxu0
    %679 = vmatprep.mubr.f32.mxu0 %v553
    %680 = vmatmul.mubr.f32.gmra.mrb[0].mxu0 %v552
    %v681 = vpop.f32.mrb[0].mxu0
    %v682 = vadd.f32 0.0, %v681
    %v683 = vpop.f32.mrb[0].mxu0
    %684 = vmatprep.mubr.f32.mxu0 %v555
    %685 = vmatmul.mubr.f32.gmra.mrb[0].mxu0 %v554
    %v686 = vpop.f32.mrb[0].mxu0
    %v687 = vadd.f32 0.0, %v686
    %v688 = vpop.f32.mrb[0].mxu0
    %689 = vmatprep.mubr.f32.mxu0 %v557
    %690 = vmatmul.mubr.f32.gmra.mrb[0].mxu0 %v556
    %v691 = vpop.f32.mrb[0].mxu0
    %v692 = vadd.f32 0.0, %v691
    %v693 = vpop.f32.mrb[0].mxu0
    %694 = vdwg.mxu0
    %695 = vadd.xlane.f32.xlu0 %v657
    %v696 = vpop.xlane.xlu0 %695
    %697 = vadd.xlane.f32.xlu0 %v662
    %v698 = vpop.xlane.xlu0 %697
    %699 = vadd.xlane.f32.xlu0 %v667
    %v700 = vpop.xlane.xlu0 %699
    %701 = vadd.xlane.f32.xlu0 %v672
    %v702 = vpop.xlane.xlu0 %701
    %703 = vadd.xlane.f32.xlu0 %v677
    %v704 = vpop.xlane.xlu0 %703
    %705 = vadd.xlane.f32.xlu0 %v682
    %v706 = vpop.xlane.xlu0 %705
    %707 = vadd.xlane.f32.xlu0 %v687
    %v708 = vpop.xlane.xlu0 %707
    %709 = vadd.xlane.f32.xlu0 %v692
    %v710 = vpop.xlane.xlu0 %709
    %v711 = vmul.f32 %v696, 0.03125
    %v712 = vmul.f32 %v698, 0.03125
    %v713 = vmul.f32 %v700, 0.03125
    %v714 = vmul.f32 %v702, 0.03125
    %v715 = vmul.f32 %v704, 0.03125
    %v716 = vmul.f32 %v706, 0.03125
    %v717 = vmul.f32 %v708, 0.03125
    %v718 = vmul.f32 %v710, 0.03125
    %v719 = vlaneseq
    %v720 = vand.u32 %v719, 127
    %vm721 = vcmp.lt.s32.totalorder %v720, 32
    %v722 = vsub.f32 %v657, %v711
    %v723 = vsub.f32 %v662, %v712
    %v724 = vsub.f32 %v667, %v713
    %v725 = vsub.f32 %v672, %v714
    %v726 = vsub.f32 %v677, %v715
    %v727 = vsub.f32 %v682, %v716
    %v728 = vsub.f32 %v687, %v717
    %v729 = vsub.f32 %v692, %v718
    %v730 = vsel %vm721, %v722, 0.0
    %v731 = vsel %vm721, %v723, 0.0
    %v732 = vsel %vm721, %v724, 0.0
    %v733 = vsel %vm721, %v725, 0.0
    %v734 = vsel %vm721, %v726, 0.0
    %v735 = vsel %vm721, %v727, 0.0
    %v736 = vsel %vm721, %v728, 0.0
    %v737 = vsel %vm721, %v729, 0.0
    %v738 = vmul.f32 %v730, %v730
    %v739 = vmul.f32 %v731, %v731
    %v740 = vmul.f32 %v732, %v732
    %v741 = vmul.f32 %v733, %v733
    %v742 = vmul.f32 %v734, %v734
    %v743 = vmul.f32 %v735, %v735
    %v744 = vmul.f32 %v736, %v736
    %v745 = vmul.f32 %v737, %v737
    %746 = vadd.xlane.f32.xlu0 %v738
    %v747 = vpop.xlane.xlu0 %746
    %748 = vadd.xlane.f32.xlu0 %v739
    %v749 = vpop.xlane.xlu0 %748
    %750 = vadd.xlane.f32.xlu0 %v740
    %v751 = vpop.xlane.xlu0 %750
    %752 = vadd.xlane.f32.xlu0 %v741
    %v753 = vpop.xlane.xlu0 %752
    %754 = vadd.xlane.f32.xlu0 %v742
    %v755 = vpop.xlane.xlu0 %754
    %756 = vadd.xlane.f32.xlu0 %v743
    %v757 = vpop.xlane.xlu0 %756
    %758 = vadd.xlane.f32.xlu0 %v744
    %v759 = vpop.xlane.xlu0 %758
    %760 = vadd.xlane.f32.xlu0 %v745
    %v761 = vpop.xlane.xlu0 %760
    %v762 = vmul.f32 %v747, 0.03125
    %v763 = vmul.f32 %v749, 0.03125
    %v764 = vmul.f32 %v751, 0.03125
    %v765 = vmul.f32 %v753, 0.03125
    %v766 = vmul.f32 %v755, 0.03125
    %v767 = vmul.f32 %v757, 0.03125
    %v768 = vmul.f32 %v759, 0.03125
    %v769 = vmul.f32 %v761, 0.03125
    %v770 = vadd.f32 %v762, 1e-05
    %v771 = vadd.f32 %v763, 1e-05
    %v772 = vadd.f32 %v764, 1e-05
    %v773 = vadd.f32 %v765, 1e-05
    %v774 = vadd.f32 %v766, 1e-05
    %v775 = vadd.f32 %v767, 1e-05
    %v776 = vadd.f32 %v768, 1e-05
    %v777 = vadd.f32 %v769, 1e-05
    %v778 = vrsqrt.pop %v770
    %v779 = vrsqrt.pop %v771
    %v780 = vrsqrt.pop %v772
    %v781 = vrsqrt.pop %v773
    %v782 = vrsqrt.pop %v774
    %v783 = vrsqrt.pop %v775
    %v784 = vrsqrt.pop %v776
    %v785 = vrsqrt.pop %v777
    %v786 = vmul.f32 %v730, %v778
    %v787 = vmul.f32 %v731, %v779
    %v788 = vmul.f32 %v732, %v780
    %v789 = vmul.f32 %v733, %v781
    %v790 = vmul.f32 %v734, %v782
    %v791 = vmul.f32 %v735, %v783
    %v792 = vmul.f32 %v736, %v784
    %v793 = vmul.f32 %v737, %v785
    %v794 = vld [vmem:[%s4] sm:$0x1]
    %v796 = vlaneseq
    %v797 = vshrl.u32 %v796, 7
    %v798 = vsub.s32 0, %v797
    %v799 = vrot.slane %v794, %v798
    %v801 = vmul.f32 %v786, %v799
    %v802 = vmul.f32 %v787, %v799
    %v803 = vmul.f32 %v788, %v799
    %v804 = vmul.f32 %v789, %v799
    %v805 = vmul.f32 %v790, %v799
    %v806 = vmul.f32 %v791, %v799
    %v807 = vmul.f32 %v792, %v799
    %v808 = vmul.f32 %v793, %v799
    %v809 = vld [vmem:[%s5] sm:$0x1]
    %v811 = vlaneseq
    %v812 = vshrl.u32 %v811, 7
    %v813 = vsub.s32 0, %v812
    %v814 = vrot.slane %v809, %v813
    %v816 = vadd.f32 %v801, %v814
    %v817 = vadd.f32 %v802, %v814
    %v818 = vadd.f32 %v803, %v814
    %v819 = vadd.f32 %v804, %v814
    %v820 = vadd.f32 %v805, %v814
    %v821 = vadd.f32 %v806, %v814
    %v822 = vadd.f32 %v807, %v814
    %v823 = vadd.f32 %v808, %v814
    %v824 = vadd.f32 %v816, %v145
    %v825 = vadd.f32 %v817, %v148
    %v826 = vadd.f32 %v818, %v153
    %v827 = vadd.f32 %v819, %v156
    %v828 = vadd.f32 %v820, %v161
    %v829 = vadd.f32 %v821, %v164
    %v830 = vadd.f32 %v822, %v169
    %v831 = vadd.f32 %v823, %v172
    %832 = vst [vmem:[#allocation8] sm:$0xff] %v824
    %833 = vst [vmem:[#allocation8 + $0x8] sm:$0xff] %v825
    %834 = vst [vmem:[#allocation8 + $0x10] sm:$0xff] %v826
    %835 = vst [vmem:[#allocation8 + $0x18] sm:$0xff] %v827
    %836 = vst [vmem:[#allocation8 + $0x20] sm:$0xff] %v828
    %837 = vst [vmem:[#allocation8 + $0x28] sm:$0xff] %v829
    %838 = vst [vmem:[#allocation8 + $0x30] sm:$0xff] %v830
    %839 = vst [vmem:[#allocation8 + $0x38] sm:$0xff] %v831
    // Predicated region
    $region34: #{tpu_custom_call.1} parent=1 // pred_check
      _
    $region35: #{tpu_custom_call.1} parent=1 // pred_check_branch
      %841 = sbr.rel (0) target = $region37
    $region36: #{tpu_custom_call.1} parent=1 // pred_region
      %s843 = ssub.s32 1024, 1024
      %844 = vsyncadd [#allocation5], %s843
      %s845 = sshll.u32 [#allocation8], 4
      %s846 = int_to_ptr.vmem [resolvable:$true] %s845
      %851 = dma.vmem_to_hbm [thread:$0]  %s846, 1024, %s6, [#allocation5], 128, 128, 8
    $region37: #{tpu_custom_call.1} parent=1 // pred_fallthru
      _
    // Predicated region
    $region38: #{tpu_custom_call.1} parent=1 // pred_check
      _
    $region39: #{tpu_custom_call.1} parent=1 // pred_check_branch
      %853 = sbr.rel (0) target = $region41
    $region40: #{tpu_custom_call.1} parent=1 // pred_region
      %854 = dma.done [#allocation5], 1024
    $region41: #{tpu_custom_call.1} parent=1 // pred_fallthru
      _
    %855 = vsyncpa [#allocation4], 1
    %856 = vsyncpa [#allocation7], 1
    %857 = vsyncpa [#allocation5], 1

</llo_original>
